<compile_context>
chip_gen: v6e
topology: v6e:2x2x1
jax: 0.10.0
libtpu: 0.0.40
codegen_flags: <defaults>
</compile_context>

<pallas_src>
import jax
import jax.numpy as jnp
from jax import lax
from jax.experimental import pallas as pl
from jax.experimental.pallas import tpu as pltpu

_VMEM_LIMIT = 64 * 1024 * 1024  # explicit scoped-VMEM cap (safe on v5e..v7x)


# ----------------------------------------------------------------------------
# Tiling helpers
# ----------------------------------------------------------------------------
def _round_up(x, m):
    return ((x + m - 1) // m) * m


def _pad_rows(x, multiple):
    pad = (-x.shape[0]) % multiple
    if pad:
        x = jnp.pad(x, ((0, pad), (0, 0)))
    return x


def _pick_row_tile(n, cap):
    """Largest tile dividing n; prefer 256-aligned, then 128-aligned, and
    >= 2 row blocks (keeps the 'parallel' i axis shardable across v7x's
    two TensorCores)."""
    cap = min(max(cap, 128), n)
    for min_blocks in (2, 1):
        for align in (256, 128):
            t = (cap // align) * align
            while t >= align:
                if n % t == 0 and n // t >= min_blocks:
                    return t
                t -= align
    return n


def _pick_col_tile(n2, cap):
    """Column tile over the fused [text | extra] axis: a multiple of 128 that
    divides n2, preferring 512/256-wide tiles (v6e/v7x MXU is 2x256x256)."""
    cap = min(max(cap, 128), n2)
    for align in (512, 256, 128):
        t = (cap // align) * align
        while t >= align:
            if n2 % t == 0:
                return t
            t -= align
    return n2


# ----------------------------------------------------------------------------
# Row-wise L2 normalization (memory-bound pre-pass)
# ----------------------------------------------------------------------------
def _normalize_kernel(scale_ref, x_ref, o_ref):
    # torch.nn.functional.normalize(p=2, dim=-1): x / clamp_min(||x||, eps),
    # with an optional scalar (logit_scale) folded in.
    x = x_ref[...].astype(jnp.float32)
    nrm = jnp.sqrt(jnp.sum(x * x, axis=-1, keepdims=True))
    inv = scale_ref[0, 0] / jnp.maximum(nrm, 1e-12)
    o_ref[...] = (x * inv).astype(o_ref.dtype)


def _l2_normalize_rows(x, scale, out_dtype, row_cap=1024):
    n, d = x.shape
    bm = _pick_row_tile(n, row_cap)
    scale_arr = jnp.asarray(scale, jnp.float32).reshape(1, 1)
    return pl.pallas_call(
        _normalize_kernel,
        grid=(n // bm,),
        out_shape=jax.ShapeDtypeStruct((n, d), out_dtype),
        in_specs=[
            pl.BlockSpec(memory_space=pltpu.MemorySpace.SMEM),   # scale
            pl.BlockSpec((bm, d), lambda r: (r, 0)),
        ],
        out_specs=pl.BlockSpec((bm, d), lambda r: (r, 0)),
        compiler_params=pltpu.CompilerParams(
            dimension_semantics=("parallel",),
            vmem_limit_bytes=_VMEM_LIMIT),
    )(scale_arr, x)


# ----------------------------------------------------------------------------
# Main loss kernel: accumulate sum(logsigmoid(-z)) per image-row block
# ----------------------------------------------------------------------------
def _siglip_neg_kernel(bias_ref, img_ref, rhs_ref, out_ref, acc_ref):
    j = pl.program_id(1)

    @pl.when(j == 0)
    def _init():
        acc_ref[...] = jnp.zeros_like(acc_ref)

    # (TM, D) x (D, TN) bf16 operands -> f32 accumulation on the MXU.
    # logit_scale is already folded into the normalized image rows.
    z = lax.dot_general(img_ref[...], rhs_ref[...],
                        (((1,), (0,)), ((), ())),
                        preferred_element_type=jnp.float32)
    z = z + bias_ref[0, 0]

    # logsigmoid(-z) = -max(z, 0) - log1p(exp(-|z|))
    # TODO(synk): on v6e/v7x the exp/log1p chain could run in bf16 on the EUP.
    loss_neg = -jnp.maximum(z, 0.0) - jnp.log1p(jnp.exp(-jnp.abs(z)))

    tm, tn = loss_neg.shape
    # Layout-free reshape (pure split of the major axis): (tm, tn) ->
    # (tm//8, 8, tn); the axis-0 sum is elementwise vreg adds on the VPU
    # (1024 parallel f32 accumulators, no XLU cross-lane reduce).
    acc_ref[...] += jnp.sum(loss_neg.reshape(tm // 8, 8, tn), axis=0)

    @pl.when(j == pl.num_programs(1) - 1)
    def _finalize():
        out_ref[...] = acc_ref[...]


# ----------------------------------------------------------------------------
# Wrapper: SigLipLoss.forward(..., output_dict=False)
# ----------------------------------------------------------------------------
def siglip_loss(image_features, text_features, extra_text_features,
                logit_scale, logit_bias, *, row_tile=1024, col_tile=512,
                compute_dtype=jnp.bfloat16):
    """Scalar contrastive_loss (the output_dict=False forward path)."""
    n, d = image_features.shape
    assert text_features.shape == (n, d)
    assert extra_text_features.shape == (n, d)

    # Pad the batch to a multiple of 128 so column blocks are always
    # 128-lane aligned (no 2N-wide fallback tile). Padded rows are all-zero;
    # their exact contribution is removed analytically below.
    np_ = _round_up(n, 128)
    img_p = _pad_rows(image_features, 128)
    txt_p = _pad_rows(text_features, 128)
    ext_p = _pad_rows(extra_text_features, 128)

    # Normalize in f32, emit bf16 MXU operands; fold logit_scale into image.
    img_n = _l2_normalize_rows(img_p, logit_scale, compute_dtype)
    txt_n = _l2_normalize_rows(txt_p, 1.0, compute_dtype)
    ext_n = _l2_normalize_rows(ext_p, 1.0, compute_dtype)

    # Fuse + transpose the bf16 normalized RHS once: (D, 2*np_).
    rhs_t = jnp.concatenate([txt_n, ext_n], axis=0).T

    tm = _pick_row_tile(np_, row_tile)
    tn = _pick_col_tile(2 * np_, col_tile)
    num_i = np_ // tm
    num_j = (2 * np_) // tn

    bias = jnp.asarray(logit_bias, jnp.float32).reshape(1, 1)

    partials = pl.pallas_call(
        _siglip_neg_kernel,
        grid=(num_i, num_j),
        out_shape=jax.ShapeDtypeStruct((num_i * 8, tn), jnp.float32),
        in_specs=[
            pl.BlockSpec(memory_space=pltpu.MemorySpace.SMEM),   # logit_bias
            pl.BlockSpec((tm, d), lambda i, j: (i, 0)),          # image rows
            pl.BlockSpec((d, tn), lambda i, j: (0, j)),          # fused RHS cols
        ],
        out_specs=pl.BlockSpec((8, tn), lambda i, j: (i, 0)),
        scratch_shapes=[pltpu.VMEM((8, tn), jnp.float32)],
        compiler_params=pltpu.CompilerParams(
            dimension_semantics=("parallel", "arbitrary"),
            vmem_limit_bytes=_VMEM_LIMIT),
    )(bias, img_n, rhs_t)

    bias_f = jnp.asarray(logit_bias, jnp.float32)

    # Sum of logsigmoid(-z) over the padded (np_, 2*np_) logits.
    neg_sum = jnp.sum(partials)

    # Every padded entry (padded row or padded column) has z == bias exactly
    # (zero dot product); subtract its known contribution.
    n_pad_terms = np_ * 2 * np_ - n * 2 * n
    if n_pad_terms:
        logsig_neg_bias = (-jnp.maximum(bias_f, 0.0)
                           - jnp.log1p(jnp.exp(-jnp.abs(bias_f))))
        neg_sum = neg_sum - jnp.float32(n_pad_terms) * logsig_neg_bias

    # Positive-pair (diagonal) correction, O(N*D) in the wrapper:
    #   logsigmoid(z) - logsigmoid(-z) == z, with diag z = <img_scaled, txt> + bias.
    # Padded rows are all-zero, so full-array sums equal the true-batch sums.
    img_f = img_n.astype(jnp.float32)
    diag_sum = (jnp.sum(img_f * txt_n.astype(jnp.float32))
                + jnp.sum(img_f * ext_n.astype(jnp.float32))
                + 2.0 * n * bias_f)

    total = neg_sum + diag_sum
    return -total / jnp.float32(n * 2 * n)


# ----------------------------------------------------------------------------
# Pure-JAX f32 reference mirroring the PyTorch module
# ----------------------------------------------------------------------------
def siglip_loss_ref(image_features, text_features, extra_text_features,
                    logit_scale, logit_bias):
    def _norm(x):
        x = x.astype(jnp.float32)
        nrm = jnp.sqrt(jnp.sum(x * x, axis=-1, keepdims=True))
        return x / jnp.maximum(nrm, 1e-12)

    img = _norm(image_features)
    txt = _norm(text_features)
    extra = _norm(extra_text_features)
    logits = logit_scale * img @ txt.T + logit_bias
    extra_logits = logit_scale * img @ extra.T + logit_bias
    n = img.shape[0]
    labels = 2.0 * jnp.eye(n, dtype=jnp.float32) - 1.0
    loss = jax.nn.log_sigmoid(labels * logits)
    extra_loss = jax.nn.log_sigmoid(labels * extra_logits)
    return -jnp.mean(jnp.concatenate([loss, extra_loss], axis=1))


if __name__ == "__main__":
    key = jax.random.PRNGKey(0)
    k1, k2, k3 = jax.random.split(key, 3)

    # Small paired image/text batch, large enough for a real (i, j) grid:
    # tm=128, tn=128 -> grid (2, 4).
    N, D = 256, 32
    image_features = jax.random.normal(k1, (N, D), dtype=jnp.float32)
    text_features = jax.random.normal(k2, (N, D), dtype=jnp.float32)
    extra_text_features = jax.random.normal(k3, (N, D), dtype=jnp.float32)

    # Typical SigLIP init: scale=10, bias=-10.
    logit_scale = jnp.float32(10.0)
    logit_bias = jnp.float32(-10.0)

    loss = siglip_loss(image_features, text_features, extra_text_features,
                       logit_scale, logit_bias, row_tile=128, col_tile=128)
    loss = jax.block_until_ready(loss)
    ref = siglip_loss_ref(image_features, text_features, extra_text_features,
                          logit_scale, logit_bias)
    # bf16 MXU operands (f32 accumulation) -> loosened tolerance vs f32 ref.
    assert jnp.allclose(loss, ref, atol=2e-3, rtol=2e-2), (loss, ref)

    # Non-multiple-of-128 batch exercises the pad + analytic-correction path.
    N2 = 200
    loss2 = siglip_loss(image_features[:N2], text_features[:N2],
                        extra_text_features[:N2], logit_scale, logit_bias)
    loss2 = jax.block_until_ready(loss2)
    ref2 = siglip_loss_ref(image_features[:N2], text_features[:N2],
                           extra_text_features[:N2], logit_scale, logit_bias)
    assert jnp.allclose(loss2, ref2, atol=2e-3, rtol=2e-2), (loss2, ref2)

    print("KERNEL_OK")
</pallas_src>

<mosaic_0001>
module attributes {stable_mosaic.version = 11 : i64} {
  func.func @_normalize_kernel(%arg0: i32, %arg1: memref<1x1xf32, #tpu.memory_space<smem>>, %arg2: memref<128x32xf32, #tpu.memory_space<vmem>>, %arg3: memref<128x32xbf16, #tpu.memory_space<vmem>>) attributes {dimension_semantics = [#tpu.dimension_semantics<parallel>], iteration_bounds = array<i64: 2>, scalar_prefetch = 0 : i64, scratch_operands = 0 : i64, tpu.core_type = #tpu.core_type<tc>, window_params = [{transform_indices = @transform_0, window_bounds = array<i64: 1, 1>}, {transform_indices = @transform_1, window_bounds = array<i64: 128, 32>}, {transform_indices = @transform_2, window_bounds = array<i64: 128, 32>}]} {
    %c0 = arith.constant 0 : index
    %c0_0 = arith.constant 0 : index
    %0 = vector.load %arg2[%c0, %c0_0] : memref<128x32xf32, #tpu.memory_space<vmem>>, vector<128x32xf32>
    %1 = arith.mulf %0, %0 : vector<128x32xf32>
    %cst = arith.constant dense<0.000000e+00> : vector<128xf32>
    %2 = vector.multi_reduction <add>, %1, %cst [1] : vector<128x32xf32> to vector<128xf32>
    %3 = vector.shape_cast %2 : vector<128xf32> to vector<128x1xf32>
    %4 = math.sqrt %3 : vector<128x1xf32>
    %c0_1 = arith.constant 0 : index
    %c0_2 = arith.constant 0 : index
    %5 = memref.load %arg1[%c0_1, %c0_2] : memref<1x1xf32, #tpu.memory_space<smem>>
    %cst_3 = arith.constant 9.99999996E-13 : f32
    %6 = vector.broadcast %cst_3 : f32 to vector<128x1xf32>
    %7 = arith.maximumf %4, %6 : vector<128x1xf32>
    %8 = vector.broadcast %5 : f32 to vector<128x1xf32>
    %9 = arith.divf %8, %7 : vector<128x1xf32>
    %10 = vector.broadcast %9 : vector<128x1xf32> to vector<128x32xf32>
    %11 = arith.mulf %0, %10 : vector<128x32xf32>
    %12 = arith.truncf %11 : vector<128x32xf32> to vector<128x32xbf16>
    %c0_4 = arith.constant 0 : index
    %c0_5 = arith.constant 0 : index
    %13 = vector.load %arg3[%c0_4, %c0_5] : memref<128x32xbf16, #tpu.memory_space<vmem>>, vector<128x32xbf16>
    tpu.vector_store %arg3[%c0_4, %c0_5], %12 {strides = array<i32>} : memref<128x32xbf16, #tpu.memory_space<vmem>>, vector<128x32xbf16>,
    return
  }
  func.func @transform_0(%arg0: i32) -> (i32, i32) {
    %c0_i32 = arith.constant 0 : i32
    %c0_i32_0 = arith.constant 0 : i32
    %c0_i32_1 = arith.constant 0 : i32
    return %c0_i32, %c0_i32_0 : i32, i32
  }
  func.func @transform_1(%arg0: i32) -> (i32, i32) {
    %c0_i32 = arith.constant 0 : i32
    %c0_i32_0 = arith.constant 0 : i32
    return %arg0, %c0_i32 : i32, i32
  }
  func.func @transform_2(%arg0: i32) -> (i32, i32) {
    %c0_i32 = arith.constant 0 : i32
    %c0_i32_0 = arith.constant 0 : i32
    return %arg0, %c0_i32 : i32, i32
  }
}

</mosaic_0001>

<llo_original>
// kernel: tpu_custom_call.1
$region0: #{tpu_custom_call.1}
  #allocation0 [shape = 'u32[]', space=smem, size = 0x4, offset = 0x4, fixed_abs, tag = 'smem constant byte address 0x4 - core index']
  #allocation1 [shape = 'u32[144,128]{1,0:T(1,128)}', space=vmem, size = 0x12000, scoped, tag = 'internal scratch']
  #allocation2 [shape = 'f32[1,1]{1,0:T(1,128)S(6)}', space=smem, size = 0x200, scoped, tag = 'scoped memory for tpu_custom_call.1']
  %s0 = inlined_call_operand.<no memory space> [shape: f32[1,1], index: 0, kind: input, shape index: {}]
  %s1 = inlined_call_operand.vmem [shape: f32[256,32], index: 1, kind: input, shape index: {}]
  %s2 = inlined_call_operand.vmem [shape: bf16[256,32], index: 2, kind: output, shape index: {}]
  %s3 = sld [smem:[#allocation0]]
  $region41: #{tpu_custom_call.1} parent=0
    _
  %s5 = ssub.s32 1, %s3
  %s6 = scalar_select 0, %s5, %s3
  %7 = sst [smem:[#allocation2]] %s0
  loop: start=0, step=1, limit=4
  $region2: #{tpu_custom_call.1} parent=0 // loop_pre_header
    _
  $region3: #{tpu_custom_call.1} parent=0 // loop_header
    %s9 = sphi 0, %s13
    %p10 = scmp.ge.s32.totalorder %s9, 4
    %s17 = sphi 0, %s17
    %s19 = sphi 0, %s17
    %s20 = sphi 0, %s19
    %s34 = sphi 0, %s20
    %s40 = sphi 0, %s42
    %s43 = sphi 0, %s40
    %s44 = sphi 0, %s43
    %s60 = sphi 0, %s44
    %s66 = sphi 0, %s68
    %s69 = sphi 0, %s66
    %s70 = sphi 0, %s69
    %s86 = sphi 0, %s70
  $region4: #{tpu_custom_call.1} parent=0 // loop_header_branch
    %12 = sbr.rel (%p10) target = $region8
  $region5: #{tpu_custom_call.1} parent=0 // loop_body
    %s14 = ssub.s32 %s9, 1
    %s15 = ssub.s32 %s9, 2
    %s16 = sadd.s32 %s9, 1
    %s18 = sadd.s32 %s17, 1
    %p21 = scmp.eq.s32.totalorder %s9, 1
    %p22 = scmp.ne.s32.totalorder %s17, %s19
    %p23 = scmp.eq.s32.totalorder %s9, 0
    %p24 = por %p22, %p23
    %p25 = scmp.ne.s32.totalorder %s17, %s19
    %p26 = scmp.eq.s32.totalorder %s14, 1
    %p27 = por %p25, %p26
    %p28 = scmp.ne.s32.totalorder %s19, %s20
    %p29 = scmp.eq.s32.totalorder %s14, 0
    %p30 = por %p28, %p29
    %p31 = scmp.ne.s32.totalorder %s19, %s20
    %p32 = scmp.eq.s32.totalorder %s15, 1
    %p33 = por %p31, %p32
    %p35 = scmp.ne.s32.totalorder %s20, %s34
    %p36 = scmp.eq.s32.totalorder %s15, 0
    %p37 = por %p35, %p36
    %s38 = ssub.s32 %s9, %s16
    %p39 = scmp.eq.s32.totalorder %s38, 0
    %s41 = sadd.s32 %s40, 1
    %s42 = scalar_select %p39, %s40, %s41
    %p45 = pneg %p39
    %p46 = scmp.eq.s32.totalorder %s9, 1
    %p47 = por %p45, %p46
    %p48 = scmp.ne.s32.totalorder %s40, %s43
    %p49 = scmp.eq.s32.totalorder %s9, 0
    %p50 = por %p48, %p49
    %p51 = scmp.ne.s32.totalorder %s40, %s43
    %p52 = scmp.eq.s32.totalorder %s14, 1
    %p53 = por %p51, %p52
    %p54 = scmp.ne.s32.totalorder %s43, %s44
    %p55 = scmp.eq.s32.totalorder %s14, 0
    %p56 = por %p54, %p55
    %p57 = scmp.ne.s32.totalorder %s43, %s44
    %p58 = scmp.eq.s32.totalorder %s15, 1
    %p59 = por %p57, %p58
    %p61 = scmp.ne.s32.totalorder %s44, %s60
    %p62 = scmp.eq.s32.totalorder %s15, 0
    %p63 = por %p61, %p62
    %s64 = ssub.s32 %s9, %s16
    %p65 = scmp.eq.s32.totalorder %s64, 0
    %s67 = sadd.s32 %s66, 1
    %s68 = scalar_select %p65, %s66, %s67
    %p71 = pneg %p65
    %p72 = scmp.eq.s32.totalorder %s9, 1
    %p73 = por %p71, %p72
    %p74 = scmp.ne.s32.totalorder %s66, %s69
    %p75 = scmp.eq.s32.totalorder %s9, 0
    %p76 = por %p74, %p75
    %p77 = scmp.ne.s32.totalorder %s66, %s69
    %p78 = scmp.eq.s32.totalorder %s14, 1
    %p79 = por %p77, %p78
    %p80 = scmp.ne.s32.totalorder %s69, %s70
    %p81 = scmp.eq.s32.totalorder %s14, 0
    %p82 = por %p80, %p81
    %p83 = scmp.ne.s32.totalorder %s69, %s70
    %p84 = scmp.eq.s32.totalorder %s15, 1
    %p85 = por %p83, %p84
    %p87 = scmp.ne.s32.totalorder %s70, %s86
    %p88 = scmp.eq.s32.totalorder %s15, 0
    %p89 = por %p87, %p88
    %p90 = scmp.le.s32.totalorder 1, %s9
    %p91 = scmp.lt.s32.totalorder %s9, 3
    %p92 = pnand %p90, %p91
    %p93 = pneg %p92
    // Predicated region
    $region9: #{tpu_custom_call.1} parent=5 // pred_check
      _
    $region10: #{tpu_custom_call.1} parent=5 // pred_check_branch
      %95 = sbr.rel (%p92) target = $region12
    $region11: #{tpu_custom_call.1} parent=5 // pred_region
      %s96 = ssub.s32 %s9, 1
      // Predicated region
      $region13: #{tpu_custom_call.1} parent=11 // pred_check
        %p97 = pneg %p30
      $region14: #{tpu_custom_call.1} parent=11 // pred_check_branch
        %99 = sbr.rel (%p97) target = $region16
      $region15: #{tpu_custom_call.1} parent=11 // pred_region
        _
      $region16: #{tpu_custom_call.1} parent=11 // pred_fallthru
        _
    $region12: #{tpu_custom_call.1} parent=5 // pred_fallthru
      _
    %p100 = scmp.lt.s32.totalorder %s9, 2
    // Predicated region
    $region17: #{tpu_custom_call.1} parent=5 // pred_check
      %p101 = pneg %p100
    $region18: #{tpu_custom_call.1} parent=5 // pred_check_branch
      %103 = sbr.rel (%p101) target = $region20
    $region19: #{tpu_custom_call.1} parent=5 // pred_region
      // Predicated region
      $region21: #{tpu_custom_call.1} parent=19 // pred_check
        %p104 = pneg %p50
      $region22: #{tpu_custom_call.1} parent=19 // pred_check_branch
        %106 = sbr.rel (%p104) target = $region24
      $region23: #{tpu_custom_call.1} parent=19 // pred_region
        %s107 = smul.u32 16, %s9
        %p108 = scmp.lt.s32.totalorder %s107, 31
        %s109 = scalar_select %p108, %s107, 31
        %s110 = smul.addr %s109, 8
        %s111 = scalar_lea.vmem %s1, %s110
        %s112 = smul.u32 16, %s9
      $region24: #{tpu_custom_call.1} parent=19 // pred_fallthru
        _
    $region20: #{tpu_custom_call.1} parent=5 // pred_fallthru
      _
    %p113 = scmp.le.s32.totalorder 1, %s9
    %p114 = scmp.lt.s32.totalorder %s9, 3
    %p115 = pnand %p113, %p114
    %p116 = pneg %p115
    // Predicated region
    $region25: #{tpu_custom_call.1} parent=5 // pred_check
      _
    $region26: #{tpu_custom_call.1} parent=5 // pred_check_branch
      %118 = sbr.rel (%p115) target = $region28
    $region27: #{tpu_custom_call.1} parent=5 // pred_region
      %s119 = ssub.s32 %s9, 1
      %p120 = pneg %p30
      %p121 = pneg %p27
      %s122 = smul.u32 16, %s14
      %p123 = scmp.lt.s32.totalorder %s122, 31
      %s124 = scalar_select %p123, %s122, 31
      %s125 = smul.addr %s124, 8
      %s126 = scalar_lea.vmem %s1, %s125
      %p127 = pneg %p56
      %p128 = pneg %p53
      %p129 = pneg %p82
      %p130 = pneg %p79
      %s131 = smul.u32 16, %s14
      %p132 = scmp.lt.s32.totalorder %s131, 31
      %s133 = scalar_select %p132, %s131, 31
      %s134 = smul.addr %s133, 4
      %s135 = scalar_lea.vmem %s2, %s134
      %s136 = smul.u32 16, %s14
      %p137 = scmp.lt.s32.totalorder %s136, 31
      %s138 = scalar_select %p137, %s136, 31
      %s139 = smul.addr %s138, 8
      %s140 = scalar_lea.vmem %s1, %s139
      %s141 = smul.u32 16, %s14
      %s142 = smul.u32 16, %s14
      %p143 = scmp.lt.s32.totalorder %s142, 31
      %s144 = scalar_select %p143, %s142, 31
      %s145 = smul.addr %s144, 4
      %s146 = scalar_lea.vmem %s2, %s145
      %s147 = smul.u32 16, %s14
      %v148 = vld [vmem:[%s140] sm:$0xff]
      %v149 = vld [vmem:[%s140 + $0x8] sm:$0xff]
      %v150 = vld [vmem:[%s140 + $0x10] sm:$0xff]
      %v151 = vld [vmem:[%s140 + $0x18] sm:$0xff]
      %v152 = vld [vmem:[%s140 + $0x20] sm:$0xff]
      %v153 = vld [vmem:[%s140 + $0x28] sm:$0xff]
      %v154 = vld [vmem:[%s140 + $0x30] sm:$0xff]
      %v155 = vld [vmem:[%s140 + $0x38] sm:$0xff]
      %v156 = vld [vmem:[%s140 + $0x40] sm:$0xff]
      %v157 = vld [vmem:[%s140 + $0x48] sm:$0xff]
      %v158 = vld [vmem:[%s140 + $0x50] sm:$0xff]
      %v159 = vld [vmem:[%s140 + $0x58] sm:$0xff]
      %v160 = vld [vmem:[%s140 + $0x60] sm:$0xff]
      %v161 = vld [vmem:[%s140 + $0x68] sm:$0xff]
      %v162 = vld [vmem:[%s140 + $0x70] sm:$0xff]
      %v163 = vld [vmem:[%s140 + $0x78] sm:$0xff]
      %v164 = vmul.f32 %v148, %v148
      %v165 = vmul.f32 %v149, %v149
      %v166 = vmul.f32 %v150, %v150
      %v167 = vmul.f32 %v151, %v151
      %v168 = vmul.f32 %v152, %v152
      %v169 = vmul.f32 %v153, %v153
      %v170 = vmul.f32 %v154, %v154
      %v171 = vmul.f32 %v155, %v155
      %v172 = vmul.f32 %v156, %v156
      %v173 = vmul.f32 %v157, %v157
      %v174 = vmul.f32 %v158, %v158
      %v175 = vmul.f32 %v159, %v159
      %v176 = vmul.f32 %v160, %v160
      %v177 = vmul.f32 %v161, %v161
      %v178 = vmul.f32 %v162, %v162
      %v179 = vmul.f32 %v163, %v163
      %vm180 = vcmask 261120
      %v181 = vsel %vm180, %v164, 0.0
      %182 = vadd.xlane.f32.xlu0 %v181
      %v183 = vpop.xlane.xlu0 %182
      %v184 = vsel %vm180, %v165, 0.0
      %185 = vadd.xlane.f32.xlu0 %v184
      %v186 = vpop.xlane.xlu0 %185
      %v187 = vsel %vm180, %v166, 0.0
      %188 = vadd.xlane.f32.xlu0 %v187
      %v189 = vpop.xlane.xlu0 %188
      %v190 = vsel %vm180, %v167, 0.0
      %191 = vadd.xlane.f32.xlu0 %v190
      %v192 = vpop.xlane.xlu0 %191
      %v193 = vsel %vm180, %v168, 0.0
      %194 = vadd.xlane.f32.xlu0 %v193
      %v195 = vpop.xlane.xlu0 %194
      %v196 = vsel %vm180, %v169, 0.0
      %197 = vadd.xlane.f32.xlu0 %v196
      %v198 = vpop.xlane.xlu0 %197
      %v199 = vsel %vm180, %v170, 0.0
      %200 = vadd.xlane.f32.xlu0 %v199
      %v201 = vpop.xlane.xlu0 %200
      %v202 = vsel %vm180, %v171, 0.0
      %203 = vadd.xlane.f32.xlu0 %v202
      %v204 = vpop.xlane.xlu0 %203
      %v205 = vsel %vm180, %v172, 0.0
      %206 = vadd.xlane.f32.xlu0 %v205
      %v207 = vpop.xlane.xlu0 %206
      %v208 = vsel %vm180, %v173, 0.0
      %209 = vadd.xlane.f32.xlu0 %v208
      %v210 = vpop.xlane.xlu0 %209
      %v211 = vsel %vm180, %v174, 0.0
      %212 = vadd.xlane.f32.xlu0 %v211
      %v213 = vpop.xlane.xlu0 %212
      %v214 = vsel %vm180, %v175, 0.0
      %215 = vadd.xlane.f32.xlu0 %v214
      %v216 = vpop.xlane.xlu0 %215
      %v217 = vsel %vm180, %v176, 0.0
      %218 = vadd.xlane.f32.xlu0 %v217
      %v219 = vpop.xlane.xlu0 %218
      %v220 = vsel %vm180, %v177, 0.0
      %221 = vadd.xlane.f32.xlu0 %v220
      %v222 = vpop.xlane.xlu0 %221
      %v223 = vsel %vm180, %v178, 0.0
      %224 = vadd.xlane.f32.xlu0 %v223
      %v225 = vpop.xlane.xlu0 %224
      %v226 = vsel %vm180, %v179, 0.0
      %227 = vadd.xlane.f32.xlu0 %v226
      %v228 = vpop.xlane.xlu0 %227
      %v229 = vrsqrt.pop %v183
      %v230 = vmul.f32 %v183, %v229
      %vm231 = vcmp.eq.f32.partialorder %v183, inf
      %v232 = vsel %vm231, %v183, %v230
      %vm233 = vcmp.eq.f32.partialorder %v183, 0.0
      %v234 = vand.u32 %v183, 2147483648
      %v235 = vsel %vm233, %v234, %v232
      %v236 = vrsqrt.pop %v186
      %v237 = vmul.f32 %v186, %v236
      %vm238 = vcmp.eq.f32.partialorder %v186, inf
      %v239 = vsel %vm238, %v186, %v237
      %vm240 = vcmp.eq.f32.partialorder %v186, 0.0
      %v241 = vand.u32 %v186, 2147483648
      %v242 = vsel %vm240, %v241, %v239
      %v243 = vrsqrt.pop %v189
      %v244 = vmul.f32 %v189, %v243
      %vm245 = vcmp.eq.f32.partialorder %v189, inf
      %v246 = vsel %vm245, %v189, %v244
      %vm247 = vcmp.eq.f32.partialorder %v189, 0.0
      %v248 = vand.u32 %v189, 2147483648
      %v249 = vsel %vm247, %v248, %v246
      %v250 = vrsqrt.pop %v192
      %v251 = vmul.f32 %v192, %v250
      %vm252 = vcmp.eq.f32.partialorder %v192, inf
      %v253 = vsel %vm252, %v192, %v251
      %vm254 = vcmp.eq.f32.partialorder %v192, 0.0
      %v255 = vand.u32 %v192, 2147483648
      %v256 = vsel %vm254, %v255, %v253
      %v257 = vrsqrt.pop %v195
      %v258 = vmul.f32 %v195, %v257
      %vm259 = vcmp.eq.f32.partialorder %v195, inf
      %v260 = vsel %vm259, %v195, %v258
      %vm261 = vcmp.eq.f32.partialorder %v195, 0.0
      %v262 = vand.u32 %v195, 2147483648
      %v263 = vsel %vm261, %v262, %v260
      %v264 = vrsqrt.pop %v198
      %v265 = vmul.f32 %v198, %v264
      %vm266 = vcmp.eq.f32.partialorder %v198, inf
      %v267 = vsel %vm266, %v198, %v265
      %vm268 = vcmp.eq.f32.partialorder %v198, 0.0
      %v269 = vand.u32 %v198, 2147483648
      %v270 = vsel %vm268, %v269, %v267
      %v271 = vrsqrt.pop %v201
      %v272 = vmul.f32 %v201, %v271
      %vm273 = vcmp.eq.f32.partialorder %v201, inf
      %v274 = vsel %vm273, %v201, %v272
      %vm275 = vcmp.eq.f32.partialorder %v201, 0.0
      %v276 = vand.u32 %v201, 2147483648
      %v277 = vsel %vm275, %v276, %v274
      %v278 = vrsqrt.pop %v204
      %v279 = vmul.f32 %v204, %v278
      %vm280 = vcmp.eq.f32.partialorder %v204, inf
      %v281 = vsel %vm280, %v204, %v279
      %vm282 = vcmp.eq.f32.partialorder %v204, 0.0
      %v283 = vand.u32 %v204, 2147483648
      %v284 = vsel %vm282, %v283, %v281
      %v285 = vrsqrt.pop %v207
      %v286 = vmul.f32 %v207, %v285
      %vm287 = vcmp.eq.f32.partialorder %v207, inf
      %v288 = vsel %vm287, %v207, %v286
      %vm289 = vcmp.eq.f32.partialorder %v207, 0.0
      %v290 = vand.u32 %v207, 2147483648
      %v291 = vsel %vm289, %v290, %v288
      %v292 = vrsqrt.pop %v210
      %v293 = vmul.f32 %v210, %v292
      %vm294 = vcmp.eq.f32.partialorder %v210, inf
      %v295 = vsel %vm294, %v210, %v293
      %vm296 = vcmp.eq.f32.partialorder %v210, 0.0
      %v297 = vand.u32 %v210, 2147483648
      %v298 = vsel %vm296, %v297, %v295
      %v299 = vrsqrt.pop %v213
      %v300 = vmul.f32 %v213, %v299
      %vm301 = vcmp.eq.f32.partialorder %v213, inf
      %v302 = vsel %vm301, %v213, %v300
      %vm303 = vcmp.eq.f32.partialorder %v213, 0.0
      %v304 = vand.u32 %v213, 2147483648
      %v305 = vsel %vm303, %v304, %v302
      %v306 = vrsqrt.pop %v216
      %v307 = vmul.f32 %v216, %v306
      %vm308 = vcmp.eq.f32.partialorder %v216, inf
      %v309 = vsel %vm308, %v216, %v307
      %vm310 = vcmp.eq.f32.partialorder %v216, 0.0
      %v311 = vand.u32 %v216, 2147483648
      %v312 = vsel %vm310, %v311, %v309
      %v313 = vrsqrt.pop %v219
      %v314 = vmul.f32 %v219, %v313
      %vm315 = vcmp.eq.f32.partialorder %v219, inf
      %v316 = vsel %vm315, %v219, %v314
      %vm317 = vcmp.eq.f32.partialorder %v219, 0.0
      %v318 = vand.u32 %v219, 2147483648
      %v319 = vsel %vm317, %v318, %v316
      %v320 = vrsqrt.pop %v222
      %v321 = vmul.f32 %v222, %v320
      %vm322 = vcmp.eq.f32.partialorder %v222, inf
      %v323 = vsel %vm322, %v222, %v321
      %vm324 = vcmp.eq.f32.partialorder %v222, 0.0
      %v325 = vand.u32 %v222, 2147483648
      %v326 = vsel %vm324, %v325, %v323
      %v327 = vrsqrt.pop %v225
      %v328 = vmul.f32 %v225, %v327
      %vm329 = vcmp.eq.f32.partialorder %v225, inf
      %v330 = vsel %vm329, %v225, %v328
      %vm331 = vcmp.eq.f32.partialorder %v225, 0.0
      %v332 = vand.u32 %v225, 2147483648
      %v333 = vsel %vm331, %v332, %v330
      %v334 = vrsqrt.pop %v228
      %v335 = vmul.f32 %v228, %v334
      %vm336 = vcmp.eq.f32.partialorder %v228, inf
      %v337 = vsel %vm336, %v228, %v335
      %vm338 = vcmp.eq.f32.partialorder %v228, 0.0
      %v339 = vand.u32 %v228, 2147483648
      %v340 = vsel %vm338, %v339, %v337
      %s341 = sld [smem:[#allocation2]]
      %v342 = vmax.f32 %v235, 1e-12
      %v343 = vmax.f32 %v242, 1e-12
      %v344 = vmax.f32 %v249, 1e-12
      %v345 = vmax.f32 %v256, 1e-12
      %v346 = vmax.f32 %v263, 1e-12
      %v347 = vmax.f32 %v270, 1e-12
      %v348 = vmax.f32 %v277, 1e-12
      %v349 = vmax.f32 %v284, 1e-12
      %v350 = vmax.f32 %v291, 1e-12
      %v351 = vmax.f32 %v298, 1e-12
      %v352 = vmax.f32 %v305, 1e-12
      %v353 = vmax.f32 %v312, 1e-12
      %v354 = vmax.f32 %v319, 1e-12
      %v355 = vmax.f32 %v326, 1e-12
      %v356 = vmax.f32 %v333, 1e-12
      %v357 = vmax.f32 %v340, 1e-12
      %v358 = vstv %s341
      %v359 = vrcp.pop %v342
      %v360 = vmul.f32 %v358, %v359
      %v361 = vrcp.pop %v343
      %v362 = vmul.f32 %v358, %v361
      %v363 = vrcp.pop %v344
      %v364 = vmul.f32 %v358, %v363
      %v365 = vrcp.pop %v345
      %v366 = vmul.f32 %v358, %v365
      %v367 = vrcp.pop %v346
      %v368 = vmul.f32 %v358, %v367
      %v369 = vrcp.pop %v347
      %v370 = vmul.f32 %v358, %v369
      %v371 = vrcp.pop %v348
      %v372 = vmul.f32 %v358, %v371
      %v373 = vrcp.pop %v349
      %v374 = vmul.f32 %v358, %v373
      %v375 = vrcp.pop %v350
      %v376 = vmul.f32 %v358, %v375
      %v377 = vrcp.pop %v351
      %v378 = vmul.f32 %v358, %v377
      %v379 = vrcp.pop %v352
      %v380 = vmul.f32 %v358, %v379
      %v381 = vrcp.pop %v353
      %v382 = vmul.f32 %v358, %v381
      %v383 = vrcp.pop %v354
      %v384 = vmul.f32 %v358, %v383
      %v385 = vrcp.pop %v355
      %v386 = vmul.f32 %v358, %v385
      %v387 = vrcp.pop %v356
      %v388 = vmul.f32 %v358, %v387
      %v389 = vrcp.pop %v357
      %v390 = vmul.f32 %v358, %v389
      %v391 = vmul.f32 %v148, %v360
      %v392 = vmul.f32 %v149, %v362
      %v393 = vmul.f32 %v150, %v364
      %v394 = vmul.f32 %v151, %v366
      %v395 = vmul.f32 %v152, %v368
      %v396 = vmul.f32 %v153, %v370
      %v397 = vmul.f32 %v154, %v372
      %v398 = vmul.f32 %v155, %v374
      %v399 = vmul.f32 %v156, %v376
      %v400 = vmul.f32 %v157, %v378
      %v401 = vmul.f32 %v158, %v380
      %v402 = vmul.f32 %v159, %v382
      %v403 = vmul.f32 %v160, %v384
      %v404 = vmul.f32 %v161, %v386
      %v405 = vmul.f32 %v162, %v388
      %v406 = vmul.f32 %v163, %v390
      %v407 = vpack.c.bf16 %v392, %v391
      %v408 = vpack.c.bf16 %v394, %v393
      %v409 = vpack.c.bf16 %v396, %v395
      %v410 = vpack.c.bf16 %v398, %v397
      %v411 = vpack.c.bf16 %v400, %v399
      %v412 = vpack.c.bf16 %v402, %v401
      %v413 = vpack.c.bf16 %v404, %v403
      %v414 = vpack.c.bf16 %v406, %v405
      %v423 = vunpack.c.l.b16 %v407
      %v424 = vunpack.c.h.b16 %v407
      %v425 = vunpack.c.l.b16 %v408
      %v426 = vunpack.c.h.b16 %v408
      %v427 = vunpack.c.l.b16 %v409
      %v428 = vunpack.c.h.b16 %v409
      %v429 = vunpack.c.l.b16 %v410
      %v430 = vunpack.c.h.b16 %v410
      %v431 = vunpack.c.l.b16 %v411
      %v432 = vunpack.c.h.b16 %v411
      %v433 = vunpack.c.l.b16 %v412
      %v434 = vunpack.c.h.b16 %v412
      %v435 = vunpack.c.l.b16 %v413
      %v436 = vunpack.c.h.b16 %v413
      %v437 = vunpack.c.l.b16 %v414
      %v438 = vunpack.c.h.b16 %v414
      %v439 = vpack.c.b16 %v423, %v423
      %v440 = vpack.c.b16 %v424, %v424
      %v441 = vpack.c.b16 %v425, %v425
      %v442 = vpack.c.b16 %v426, %v426
      %v443 = vpack.c.b16 %v427, %v427
      %v444 = vpack.c.b16 %v428, %v428
      %v445 = vpack.c.b16 %v429, %v429
      %v446 = vpack.c.b16 %v430, %v430
      %v447 = vpack.c.b16 %v431, %v431
      %v448 = vpack.c.b16 %v432, %v432
      %v449 = vpack.c.b16 %v433, %v433
      %v450 = vpack.c.b16 %v434, %v434
      %v451 = vpack.c.b16 %v435, %v435
      %v452 = vpack.c.b16 %v436, %v436
      %v453 = vpack.c.b16 %v437, %v437
      %v454 = vpack.c.b16 %v438, %v438
      %vm471 = vcmask 257024
      %472 = vst.msk [vmem:[%s146] sm:$0xf] %vm471, %v439
      %473 = vst.msk [vmem:[%s146 + $0x4] sm:$0xf] %vm471, %v440
      %474 = vst.msk [vmem:[%s146 + $0x8] sm:$0xf] %vm471, %v441
      %475 = vst.msk [vmem:[%s146 + $0xc] sm:$0xf] %vm471, %v442
      %476 = vst.msk [vmem:[%s146 + $0x10] sm:$0xf] %vm471, %v443
      %477 = vst.msk [vmem:[%s146 + $0x14] sm:$0xf] %vm471, %v444
      %478 = vst.msk [vmem:[%s146 + $0x18] sm:$0xf] %vm471, %v445
      %479 = vst.msk [vmem:[%s146 + $0x1c] sm:$0xf] %vm471, %v446
      %480 = vst.msk [vmem:[%s146 + $0x20] sm:$0xf] %vm471, %v447
      %481 = vst.msk [vmem:[%s146 + $0x24] sm:$0xf] %vm471, %v448
      %482 = vst.msk [vmem:[%s146 + $0x28] sm:$0xf] %vm471, %v449
      %483 = vst.msk [vmem:[%s146 + $0x2c] sm:$0xf] %vm471, %v450
      %484 = vst.msk [vmem:[%s146 + $0x30] sm:$0xf] %vm471, %v451
      %485 = vst.msk [vmem:[%s146 + $0x34] sm:$0xf] %vm471, %v452
      %486 = vst.msk [vmem:[%s146 + $0x38] sm:$0xf] %vm471, %v453
      %487 = vst.msk [vmem:[%s146 + $0x3c] sm:$0xf] %vm471, %v454
      %s488 = smul.u32 16, %s14
      %p489 = scmp.lt.s32.totalorder %s488, 31
      %s490 = scalar_select %p489, %s488, 31
      %s491 = smul.addr %s490, 4
      %s492 = scalar_lea.vmem %s2, %s491
      // Predicated region
      $region29: #{tpu_custom_call.1} parent=27 // pred_check
        %p493 = pneg %p79
      $region30: #{tpu_custom_call.1} parent=27 // pred_check_branch
        %495 = sbr.rel (%p493) target = $region32
      $region31: #{tpu_custom_call.1} parent=27 // pred_region
        %s496 = smul.u32 16, %s14
      $region32: #{tpu_custom_call.1} parent=27 // pred_fallthru
        _
    $region28: #{tpu_custom_call.1} parent=5 // pred_fallthru
      _
    %p497 = scmp.le.s32.totalorder 2, %s9
    // Predicated region
    $region33: #{tpu_custom_call.1} parent=5 // pred_check
      %p498 = pneg %p497
    $region34: #{tpu_custom_call.1} parent=5 // pred_check_branch
      %500 = sbr.rel (%p498) target = $region36
    $region35: #{tpu_custom_call.1} parent=5 // pred_region
      %s501 = ssub.s32 %s9, 2
      // Predicated region
      $region37: #{tpu_custom_call.1} parent=35 // pred_check
        %p502 = pneg %p85
      $region38: #{tpu_custom_call.1} parent=35 // pred_check_branch
        %504 = sbr.rel (%p502) target = $region40
      $region39: #{tpu_custom_call.1} parent=35 // pred_region
        %s505 = smul.u32 16, %s15
        %p506 = scmp.lt.s32.totalorder %s505, 31
        %s507 = scalar_select %p506, %s505, 31
        %s508 = smul.addr %s507, 4
        %s509 = scalar_lea.vmem %s2, %s508
      $region40: #{tpu_custom_call.1} parent=35 // pred_fallthru
        _
    $region36: #{tpu_custom_call.1} parent=5 // pred_fallthru
      _
  $region6: #{tpu_custom_call.1} parent=0 // loop_footer
    %s13 = sadd.s32 1, %s9
  $region7: #{tpu_custom_call.1} parent=0 // loop_footer_branch
    %8 = sbr.rel target = $region3
  $region8: #{tpu_custom_call.1} parent=0 // loop_exit
    _

</llo_original>
